<compile_context>
chip_gen: v6e
topology: v6e:2x2x1
jax: 0.10.0
libtpu: 0.0.40
codegen_flags: <defaults>
</compile_context>

<pallas_src>
import jax
import jax.numpy as jnp
from jax.experimental import pallas as pl
from jax.experimental.pallas import tpu as pltpu


def _swish_gate_kernel(x_ref, o_ref):
    x = x_ref[...]
    # f32 compute for the transcendental (exact identity for x*sigmoid(x));
    # vreg-only cast, HBM traffic stays in the storage dtype.
    xf = x.astype(jnp.float32)
    y = 0.5 * xf * (1.0 + jnp.tanh(0.5 * xf))
    o_ref[...] = y.astype(o_ref.dtype)


def _pick_lane_width(n: int, max_lane: int = 2048):
    """Largest multiple of 128 (<= max_lane) that divides n, or None."""
    if n % 128 != 0:
        return None
    w = (min(max_lane, n) // 128) * 128
    while w >= 128:
        if n % w == 0:
            return w
        w -= 128
    return 128  # unreachable: n % 128 == 0 guarantees 128 divides n


def _round_up(v: int, m: int) -> int:
    return ((v + m - 1) // m) * m


def swish_gate(
    x: jax.Array,
    *,
    target_block_bytes: int = 4 * 1024 * 1024,
    donate: bool = False,
) -> jax.Array:
    """Applies y = x * sigmoid(x) elementwise via a Pallas TPU kernel."""
    orig_shape = x.shape
    orig_dtype = x.dtype
    n = x.size
    if n == 0:
        return x
    itemsize = jnp.dtype(orig_dtype).itemsize

    # ---- Lane-dense factorization (no pad/slice when n % 128 == 0) ----
    lane_width = _pick_lane_width(n)
    padded = lane_width is None
    if padded:
        # Fallback ragged path: zero-pad to a 512-lane slab (swish(0) == 0).
        lane_width = 512
        n_pad = pl.cdiv(n, lane_width) * lane_width
        flat = jnp.pad(x.reshape(-1), (0, n_pad - n))
    else:
        n_pad = n
        flat = x.reshape(-1)
    rows = n_pad // lane_width
    x2d = flat.reshape(rows, lane_width)

    # ---- Row tiling: ~4 MiB blocks, multiple of 8 sublanes, >= 2 grid steps
    # for medium inputs so v7x's two TensorCores both get work. ----
    row_cap = max(8, (target_block_bytes // (lane_width * itemsize)) // 8 * 8)
    if rows < 16:
        tile = rows  # full-extent block is always legal under (8,128) tiling
    else:
        num_blocks = max(2, pl.cdiv(rows, row_cap))
        tile = min(rows, _round_up(pl.cdiv(rows, num_blocks), 8))
    grid = (pl.cdiv(rows, tile),)

    out = pl.pallas_call(
        _swish_gate_kernel,
        out_shape=jax.ShapeDtypeStruct((rows, lane_width), orig_dtype),
        grid_spec=pltpu.PrefetchScalarGridSpec(
            num_scalar_prefetch=0,
            grid=grid,
            in_specs=[pl.BlockSpec((tile, lane_width), lambda i: (i, 0))],
            out_specs=pl.BlockSpec((tile, lane_width), lambda i: (i, 0)),
        ),
        compiler_params=pltpu.CompilerParams(
            # Row blocks are independent -> megacore-shardable on v7x.
            dimension_semantics=("parallel",),
            # 4 MiB blocks x 4 buffers (in+out double-buffered) = 16 MiB,
            # safely under this limit on every generation (v7x: 64 MiB phys).
            vmem_limit_bytes=32 * 1024 * 1024,
        ),
        input_output_aliases=({0: 0} if donate else {}),
    )(x2d)

    out_flat = out.reshape(-1)
    if padded and n_pad != n:
        out_flat = out_flat[:n]
    return out_flat.reshape(orig_shape)


if __name__ == "__main__":
    key = jax.random.PRNGKey(0)

    # (batch, seq, hidden) = (2, 8, 32): RetNet-style usage; n = 512 is a
    # multiple of 128 -> zero-copy lane-dense path, single block.
    x = jax.random.normal(key, (2, 8, 32), dtype=jnp.float32)
    y = swish_gate(x)
    jax.block_until_ready(y)
    y_ref = x * jax.nn.sigmoid(x)
    assert y.shape == x.shape and y.dtype == x.dtype
    assert jnp.allclose(y, y_ref, atol=1e-5, rtol=1e-5)

    # Non-multiple-of-128 total size: exercises the pad + ragged-block fallback.
    x2 = jax.random.normal(jax.random.PRNGKey(1), (3, 7, 33), dtype=jnp.float32)
    y2 = swish_gate(x2)
    jax.block_until_ready(y2)
    y2_ref = x2 * jax.nn.sigmoid(x2)
    assert y2.shape == x2.shape and y2.dtype == x2.dtype
    assert jnp.allclose(y2, y2_ref, atol=1e-5, rtol=1e-5)

    # Medium input: multi-block grid (>= 2 steps -> both v7x TCs get work).
    x3 = jax.random.normal(jax.random.PRNGKey(2), (2, 64, 256), dtype=jnp.float32)
    y3 = swish_gate(x3)
    jax.block_until_ready(y3)
    y3_ref = x3 * jax.nn.sigmoid(x3)
    assert y3.shape == x3.shape and y3.dtype == x3.dtype
    assert jnp.allclose(y3, y3_ref, atol=1e-5, rtol=1e-5)

    # bf16 storage path (compute stays f32 inside the kernel).
    x4 = jax.random.normal(jax.random.PRNGKey(3), (2, 16, 128), dtype=jnp.bfloat16)
    y4 = swish_gate(x4)
    jax.block_until_ready(y4)
    x4f = x4.astype(jnp.float32)
    y4_ref = (x4f * jax.nn.sigmoid(x4f)).astype(jnp.bfloat16)
    assert y4.shape == x4.shape and y4.dtype == x4.dtype
    assert jnp.allclose(y4.astype(jnp.float32), y4_ref.astype(jnp.float32),
                        atol=2e-2, rtol=2e-2)

    print("KERNEL_OK")
</pallas_src>

<mosaic_0001>
module attributes {stable_mosaic.version = 11 : i64} {
  func.func @_swish_gate_kernel(%arg0: i32, %arg1: memref<1x512xf32, #tpu.memory_space<vmem>>, %arg2: memref<1x512xf32, #tpu.memory_space<vmem>>) attributes {dimension_semantics = [#tpu.dimension_semantics<parallel>], iteration_bounds = array<i64: 1>, scalar_prefetch = 0 : i64, scratch_operands = 0 : i64, tpu.core_type = #tpu.core_type<tc>, window_params = [{transform_indices = @transform_0, window_bounds = array<i64: 1, 512>}, {transform_indices = @transform_1, window_bounds = array<i64: 1, 512>}]} {
    %c0 = arith.constant 0 : index
    %c0_0 = arith.constant 0 : index
    %0 = vector.load %arg1[%c0, %c0_0] : memref<1x512xf32, #tpu.memory_space<vmem>>, vector<1x512xf32>
    %cst = arith.constant 5.000000e-01 : f32
    %1 = vector.broadcast %cst : f32 to vector<1x512xf32>
    %2 = arith.mulf %1, %0 : vector<1x512xf32>
    %cst_1 = arith.constant 5.000000e-01 : f32
    %3 = vector.broadcast %cst_1 : f32 to vector<1x512xf32>
    %4 = arith.mulf %3, %0 : vector<1x512xf32>
    %5 = math.tanh %4 : vector<1x512xf32>
    %cst_2 = arith.constant 1.000000e+00 : f32
    %6 = vector.broadcast %cst_2 : f32 to vector<1x512xf32>
    %7 = arith.addf %6, %5 : vector<1x512xf32>
    %8 = arith.mulf %2, %7 : vector<1x512xf32>
    %c0_3 = arith.constant 0 : index
    %c0_4 = arith.constant 0 : index
    %9 = vector.load %arg2[%c0_3, %c0_4] : memref<1x512xf32, #tpu.memory_space<vmem>>, vector<1x512xf32>
    tpu.vector_store %arg2[%c0_3, %c0_4], %8 {strides = array<i32>} : memref<1x512xf32, #tpu.memory_space<vmem>>, vector<1x512xf32>,
    return
  }
  func.func @transform_0(%arg0: i32) -> (i32, i32) {
    %c0_i32 = arith.constant 0 : i32
    %c0_i32_0 = arith.constant 0 : i32
    return %arg0, %c0_i32 : i32, i32
  }
  func.func @transform_1(%arg0: i32) -> (i32, i32) {
    %c0_i32 = arith.constant 0 : i32
    %c0_i32_0 = arith.constant 0 : i32
    return %arg0, %c0_i32 : i32, i32
  }
}

</mosaic_0001>

<llo_original>
// kernel: tpu_custom_call.1
$region0: #{tpu_custom_call.1}
  #allocation0 [shape = 'u32[]', space=smem, size = 0x4, offset = 0x4, fixed_abs, tag = 'smem constant byte address 0x4 - core index']
  #allocation1 [shape = 'u32[144,128]{1,0:T(1,128)}', space=vmem, size = 0x12000, scoped, tag = 'internal scratch']
  %s0 = inlined_call_operand.hbm [shape: f32[1,512], index: 0, kind: input, shape index: {}]
  %s1 = inlined_call_operand.hbm [shape: f32[1,512], index: 1, kind: output, shape index: {}]
  %s2 = sld [smem:[#allocation0]]
  $region18: #{tpu_custom_call.1} parent=0
    _
  %s4 = ssub.s32 1, %s2
  %s5 = scalar_select 0, %s4, %s2
  $region1: #{tpu_custom_call.1} parent=0
    #allocation2 [shape = 'u8[2048]{0}', space=vmem, size = 0x800, scoped, tag = 'input window, operand 0, single buffered']
    #allocation3 [shape = 's32[1]{0}', space=sflag, size = 0x4, scoped, tag = 'scoped memory for tpu_custom_call.1']
    #allocation4 [shape = 's32[1]{0}', space=sflag, size = 0x4, scoped, tag = 'scoped memory for tpu_custom_call.1']
    #allocation5 [shape = 'u8[2048]{0}', space=vmem, size = 0x800, scoped, tag = 'output window, operand 0, single buffered']
    %6 = vsyncpa [#allocation3], 0
    %7 = vsyncpa [#allocation4], 0
    // Predicated region
    $region2: #{tpu_custom_call.1} parent=1 // pred_check
      _
    $region3: #{tpu_custom_call.1} parent=1 // pred_check_branch
      %9 = sbr.rel (0) target = $region5
    $region4: #{tpu_custom_call.1} parent=1 // pred_region
      %s11 = ssub.s32 64, 64
      %12 = vsyncadd [#allocation3], %s11
      %s14 = sshll.u32 [#allocation2], 4
      %s15 = int_to_ptr.vmem [resolvable:$true] %s14
      %17 = dma.hbm_to_vmem [thread:$0]  %s0, 64, %s15, [#allocation3]
    $region5: #{tpu_custom_call.1} parent=1 // pred_fallthru
      _
    // Predicated region
    $region6: #{tpu_custom_call.1} parent=1 // pred_check
      _
    $region7: #{tpu_custom_call.1} parent=1 // pred_check_branch
      %19 = sbr.rel (0) target = $region9
    $region8: #{tpu_custom_call.1} parent=1 // pred_region
      %20 = dma.done [#allocation3], 64
    $region9: #{tpu_custom_call.1} parent=1 // pred_fallthru
      _
    %v21 = vld [vmem:[#allocation2] sm:$0xf]
    %v22 = vmul.f32 %v21, 0.5
    %v23 = vtanh.pop %v22
    %v24 = vadd.f32 %v23, 1.0
    %v25 = vmul.f32 %v22, %v24
    %v26 = vlaneseq
    %vm27 = vcmp.ge.s32.totalorder %v26, 0
    %vm28 = vcmp.lt.s32.totalorder %v26, 512
    %vm29 = vmand %vm27, %vm28
    %30 = vst.msk [vmem:[#allocation5] sm:$0xf] %vm29, %v25
    // Predicated region
    $region10: #{tpu_custom_call.1} parent=1 // pred_check
      _
    $region11: #{tpu_custom_call.1} parent=1 // pred_check_branch
      %32 = sbr.rel (0) target = $region13
    $region12: #{tpu_custom_call.1} parent=1 // pred_region
      %s34 = ssub.s32 64, 64
      %35 = vsyncadd [#allocation4], %s34
      %s37 = sshll.u32 [#allocation5], 4
      %s38 = int_to_ptr.vmem [resolvable:$true] %s37
      %40 = dma.vmem_to_hbm [thread:$0]  %s38, 64, %s1, [#allocation4]
    $region13: #{tpu_custom_call.1} parent=1 // pred_fallthru
      _
    // Predicated region
    $region14: #{tpu_custom_call.1} parent=1 // pred_check
      _
    $region15: #{tpu_custom_call.1} parent=1 // pred_check_branch
      %42 = sbr.rel (0) target = $region17
    $region16: #{tpu_custom_call.1} parent=1 // pred_region
      %43 = dma.done [#allocation4], 64
    $region17: #{tpu_custom_call.1} parent=1 // pred_fallthru
      _
    %44 = vsyncpa [#allocation3], 1
    %45 = vsyncpa [#allocation4], 1

</llo_original>
